<compile_context>
chip_gen: v5e
topology: v5e:2x2
jax: 0.10.0
libtpu: 0.0.40
codegen_flags: <defaults>
</compile_context>

<pallas_src>
import functools

import jax
import jax.numpy as jnp
from jax.experimental import pallas as pl
from jax.experimental.pallas import tpu as pltpu


def _identity_dma_kernel(x_hbm_ref, o_hbm_ref, copy_sem):
    # Single HBM->HBM DMA: no VMEM staging, no vld/vst work, no lane masking.
    copy = pltpu.make_async_copy(x_hbm_ref, o_hbm_ref, copy_sem)
    copy.start()
    copy.wait()


@jax.jit
def _identity_pallas(x):
    nbytes = x.size * x.dtype.itemsize
    return pl.pallas_call(
        _identity_dma_kernel,
        out_shape=jax.ShapeDtypeStruct(x.shape, x.dtype),
        # Raw HBM refs for both operands; the kernel drives the copy itself.
        in_specs=[pl.BlockSpec(memory_space=pl.ANY)],
        out_specs=pl.BlockSpec(memory_space=pl.ANY),
        scratch_shapes=[pltpu.SemaphoreType.DMA(())],
        # Advisory hint for XLA's scheduler: pure memory op, 2x nbytes traffic.
        cost_estimate=pl.CostEstimate(
            flops=0, transcendentals=0, bytes_accessed=2 * nbytes
        ),
    )(x)


def base_network_forward(*inputs, run_identity_kernel: bool = False):
    """Stand-in for BaseNetwork.forward (a no-op `pass` in PyTorch).

    Default path: return the input(s) unchanged — zero HBM traffic, matching
    the reference no-op semantics as closely as an executable wrapper can.

    If `run_identity_kernel=True`, the first input is routed through an
    identity Pallas TPU kernel implemented as a single HBM->HBM async DMA
    (no VMEM staging).  This still reads and writes the full array (2x nbytes
    of HBM traffic); it exists only as an executable/benchmarkable stand-in.
    """
    if not inputs:
        return None
    x = inputs[0]
    if run_identity_kernel and getattr(x, "ndim", 0) >= 1:
        x = _identity_pallas(x)
    if len(inputs) == 1:
        return x
    return (x,) + tuple(inputs[1:])


if __name__ == "__main__":
    key = jax.random.PRNGKey(0)
    shape = (2, 4, 16, 16)  # small NCHW-style input for an image-network base class
    x = jax.random.normal(key, shape, dtype=jnp.float32)

    # Default (faithful) path: pure no-op, input returned untouched.
    y_noop = base_network_forward(x)
    assert y_noop is x

    # Flag-gated Pallas path: identity via one HBM->HBM async DMA.
    y = base_network_forward(x, run_identity_kernel=True)
    y = jax.block_until_ready(y)

    assert y.shape == shape and y.dtype == jnp.float32
    assert bool(jnp.array_equal(y, x))

    print("KERNEL_OK")
</pallas_src>

<mosaic_0001>
module attributes {stable_mosaic.version = 11 : i64} {
  func.func @_identity_dma_kernel(%arg0: memref<2x4x16x16xf32, #tpu.memory_space<any>>, %arg1: memref<2x4x16x16xf32, #tpu.memory_space<any>>, %arg2: memref<!tpu.dma_semaphore, #tpu.memory_space<semaphore_mem>>) attributes {dimension_semantics = [], scalar_prefetch = 0 : i64, scratch_operands = 1 : i64, tpu.core_type = #tpu.core_type<tc>} {
    tpu.enqueue_dma source(%arg0 : memref<2x4x16x16xf32, #tpu.memory_space<any>>) target(%arg1 : memref<2x4x16x16xf32, #tpu.memory_space<any>>) target_semaphore(%arg2 : memref<!tpu.dma_semaphore, #tpu.memory_space<semaphore_mem>>)
    tpu.wait_dma2 semaphore(%arg2 : memref<!tpu.dma_semaphore, #tpu.memory_space<semaphore_mem>>) src(%arg0 : memref<2x4x16x16xf32, #tpu.memory_space<any>>) dst(%arg1 : memref<2x4x16x16xf32, #tpu.memory_space<any>>)
    return
  }
}

</mosaic_0001>

<llo_original>
// kernel: _identity_pallas.1
$region0: #{_identity_pallas.1}
  #allocation0 [shape = 'u32[]', space=smem, size = 0x4, offset = 0x4, fixed_abs, tag = 'smem constant byte address 0x4 - core index']
  #allocation1 [shape = 'u32[72,128]{1,0:T(1,128)}', space=vmem, size = 0x9000, scoped, tag = 'internal scratch']
  #allocation2 [shape = 's32[1]{0}', space=sflag, size = 0x4, scoped, tag = 'scratch operand']
  #allocation3 [shape = 's32[]', space=sflag, size = 0x4, offset = 0, fixed_abs, tag = 'sflag constant byte address 0x0 - dummy sync flag']
  #allocation4 [shape = 'u32[0]{0}', space=smem, size = 0, offset = 0, fixed_abs, tag = 'smem constant byte address 0x0 - null']
  %s0 = inlined_call_operand.hbm [shape: f32[2,4,16,16], index: 0, kind: input, shape index: {}]
  %s1 = inlined_call_operand.hbm [shape: f32[2,4,16,16], index: 1, kind: output, shape index: {}]
  %s2 = sld [smem:[#allocation0]]
  $region2: #{_identity_pallas.1} parent=0
    _
  %s4 = ssub.s32 1, %s2
  %s5 = scalar_select 0, %s4, %s2
  %s7 = sshll.u32 1, 14
  %s8 = sxor.u32 4294967295, %s7
  %s10 = sshll.u32 %s0, 4
  %s11 = int_to_ptr.hbm [resolvable:$true] %s10
  %s12 = sshll.u32 %s1, 4
  %s13 = int_to_ptr.hbm [resolvable:$true] %s12
  %16 = dma.general %s11, 2048, %s13, [#allocation2], [#allocation3], [#allocation4], 0, 0
  %s17 = smul.u32 2, 4
  %s18 = smul.u32 %s17, 16
  %s19 = smul.u32 %s18, 1
  %s20 = sshll.u32 %s19, 4
  %21 = dma.done [#allocation2], %s20
  %22 = vsyncmov [#allocation2]
  %s23 = vpop.sfrf %22
  %p24 = scmp.eq.s32.totalorder %s23, 0
  %p25 = pneg %p24
  %27 = shalt.err (%p25)

</llo_original>
